<compile_context>
chip_gen: v7x
topology: tpu7x:2x2x1
jax: 0.10.0
libtpu: 0.0.40
codegen_flags: <defaults>
</compile_context>

<pallas_src>
import math

import jax
import jax.numpy as jnp
from jax.experimental import pallas as pl
from jax.experimental.pallas import tpu as pltpu

EPS = 1e-5


# ----------------------------- Pallas kernels ------------------------------ #

def _lin_relu_kernel(x_ref, w_ref, b_ref, o_ref):
    # Linear (BN affine pre-folded into W/b) -> ReLU.
    # bf16 operands feed the MXU; accumulate and post-math in f32.
    y = jnp.dot(x_ref[...].astype(jnp.bfloat16), w_ref[...],
                preferred_element_type=jnp.float32)
    y = y + b_ref[...]
    o_ref[...] = jnp.maximum(y, 0.0).astype(o_ref.dtype)


def lin_relu(x, w_bf16, b, tm=256):
    """x: [M, K] f32, w_bf16: [K, H] bf16 (BN folded), b: [1, H] f32."""
    M, K = x.shape
    _, H = w_bf16.shape
    tm = M if M <= tm else tm          # full-dim fallback keeps (8,128) rule satisfied
    return pl.pallas_call(
        _lin_relu_kernel,
        out_shape=jax.ShapeDtypeStruct((M, H), jnp.float32),
        grid=(pl.cdiv(M, tm),),
        in_specs=[
            pl.BlockSpec((tm, K), lambda i: (i, 0)),     # streamed activations
            pl.BlockSpec((K, H), lambda i: (0, 0)),      # resident weights
            pl.BlockSpec((1, H), lambda i: (0, 0)),      # resident bias
        ],
        out_specs=pl.BlockSpec((tm, H), lambda i: (i, 0)),
        compiler_params=pltpu.CompilerParams(dimension_semantics=("parallel",)),
    )(x, w_bf16, b)


def _bn_relu_pool_kernel(x_ref, scx_ref, shx_ref, sce_ref, she_ref,
                         xo_ref, eo_ref, acc_ref):
    # Fused: x = relu(bnsc(x)); embd = relu(bns_embd(x.sum(dim=1)))
    # Grid axis 0 = batch (parallel), axis 1 = N-tiles (arbitrary reduction).
    n = pl.program_id(1)

    @pl.when(n == 0)
    def _():
        acc_ref[...] = jnp.zeros_like(acc_ref)

    y = jnp.maximum(x_ref[...] * scx_ref[...] + shx_ref[...], 0.0)   # [1, tn, H]
    xo_ref[...] = y.astype(xo_ref.dtype)
    acc_ref[...] += jnp.sum(y, axis=1)                               # [1, H]

    @pl.when(n == pl.num_programs(1) - 1)
    def _():
        eo_ref[...] = jnp.maximum(
            acc_ref[...] * sce_ref[...] + she_ref[...], 0.0).astype(eo_ref.dtype)


def bn_relu_pool(x, sc_x, sh_x, sc_e, sh_e, tn=256):
    """x: [B, N, H]. Returns (relu(bn(x)) [B,N,H], relu(bn_embd(sum_N)) [B,H])."""
    B, N, H = x.shape
    tn = N if N <= tn else tn
    return pl.pallas_call(
        _bn_relu_pool_kernel,
        out_shape=(jax.ShapeDtypeStruct((B, N, H), jnp.float32),
                   jax.ShapeDtypeStruct((B, H), jnp.float32)),
        grid=(B, pl.cdiv(N, tn)),
        in_specs=[
            pl.BlockSpec((1, tn, H), lambda b, n: (b, n, 0)),
            pl.BlockSpec((1, H), lambda b, n: (0, 0)),
            pl.BlockSpec((1, H), lambda b, n: (0, 0)),
            pl.BlockSpec((1, H), lambda b, n: (0, 0)),
            pl.BlockSpec((1, H), lambda b, n: (0, 0)),
        ],
        out_specs=(pl.BlockSpec((1, tn, H), lambda b, n: (b, n, 0)),
                   pl.BlockSpec((1, H), lambda b, n: (b, 0))),     # resident over n
        scratch_shapes=[pltpu.VMEM((1, H), jnp.float32)],
        compiler_params=pltpu.CompilerParams(
            dimension_semantics=("parallel", "arbitrary")),
    )(x, sc_x, sh_x, sc_e, sh_e)


def _linear_kernel(x_ref, w_ref, b_ref, o_ref):
    y = jnp.dot(x_ref[...].astype(jnp.bfloat16), w_ref[...],
                preferred_element_type=jnp.float32) + b_ref[...]
    o_ref[...] = y.astype(o_ref.dtype)


def linear(x, w_bf16, b, tm=256):
    """x: [M, K] f32, w_bf16: [K, C] bf16, b: [1, C] f32. C should be lane-padded."""
    M, K = x.shape
    _, C = w_bf16.shape
    tm = M if M <= tm else tm
    return pl.pallas_call(
        _linear_kernel,
        out_shape=jax.ShapeDtypeStruct((M, C), jnp.float32),
        grid=(pl.cdiv(M, tm),),
        in_specs=[
            pl.BlockSpec((tm, K), lambda i: (i, 0)),
            pl.BlockSpec((K, C), lambda i: (0, 0)),      # resident weights
            pl.BlockSpec((1, C), lambda i: (0, 0)),
        ],
        out_specs=pl.BlockSpec((tm, C), lambda i: (i, 0)),
        compiler_params=pltpu.CompilerParams(dimension_semantics=("parallel",)),
    )(x, w_bf16, b)


# ------------------------------ glue / params ------------------------------ #

def bn_affine(gamma, beta, mean, var, eps=EPS):
    """Fold eval-mode BatchNorm into per-channel scale/shift (shape [1, C])."""
    scale = gamma / jnp.sqrt(var + eps)
    shift = beta - mean * scale
    return scale.reshape(1, -1), shift.reshape(1, -1)


def _pad_lanes(a, axis, mult=128):
    """Zero-pad `axis` of `a` up to a multiple of `mult` (lane-dense stores)."""
    size = a.shape[axis]
    pad = (-size) % mult
    if pad == 0:
        return a
    widths = [(0, 0)] * a.ndim
    widths[axis] = (0, pad)
    return jnp.pad(a, widths)


def init_params(key, in_x, hid_x, out_x, num_classes, num_layers):
    def lin_init(k, fan_in, fan_out):
        bound = 1.0 / math.sqrt(fan_in)
        k1, k2 = jax.random.split(k)
        w = jax.random.uniform(k1, (fan_in, fan_out), jnp.float32, -bound, bound)
        b = jax.random.uniform(k2, (1, fan_out), jnp.float32, -bound, bound)
        return w, b

    def bn_params(c):
        # fresh reset_parameters(): gamma=1, beta=0, running_mean=0, running_var=1
        return (jnp.ones((c,), jnp.float32), jnp.zeros((c,), jnp.float32),
                jnp.zeros((c,), jnp.float32), jnp.ones((c,), jnp.float32))

    k0, k1 = jax.random.split(key)
    params = {}
    params["W_start"], params["b_start"] = lin_init(k0, in_x, hid_x)
    params["bn_start"] = bn_params(hid_x)
    dims = [hid_x] * (num_layers - 1) + [out_x]
    params["bnsc"] = [bn_params(d) for d in dims]
    params["bns_embd"] = [bn_params(d) for d in dims]
    lin_in = hid_x * (num_layers - 1) + out_x
    params["W_lin"], params["b_lin"] = lin_init(k1, lin_in, num_classes)
    return params


def densepool_e_forward(x, adj, e, params, num_layers=3):
    """x: [B, N, Fx], adj: [B, N, N], e: [B, N, N, Fe]."""
    B, N, Fx = x.shape
    num_classes = params["W_lin"].shape[1]

    # lin_before_conv: Linear + BatchNorm1d + ReLU.
    # Fold the eval-mode BN affine into the linear weights (trace-time constant
    # folding): y = (xW + b)*s + t  ==  x(W*s) + (b*s + t).
    scale0, shift0 = bn_affine(*params["bn_start"])
    W0 = (params["W_start"] * scale0).astype(jnp.bfloat16)
    b0 = params["b_start"] * scale0 + shift0
    h = lin_relu(x.reshape(B * N, Fx), W0, b0)
    H = h.shape[-1]
    x = h.reshape(B, N, H)

    embds = []
    pool_loss = jnp.float32(0.0)
    for i in range(num_layers):
        # TODO(synk): cal_s / DenseEGIN conv / densepool / init_conv_pool are
        # NotImplementedError (or undefined) in the reference module; x, adj, e
        # pass through unchanged (requires out_channels_x == hidden_channels_x).
        sc, sh = bn_affine(*params["bnsc"][i])
        sce, she = bn_affine(*params["bns_embd"][i])
        # Fused: bnsc+ReLU on x  AND  sum(dim=1)+bns_embd+ReLU, one HBM pass.
        x, embd = bn_relu_pool(x, sc, sh, sce, she)
        # dropout: eval-mode semantics -> identity
        embds.append(embd)

    embds = jnp.concatenate(embds, axis=-1)                 # [B, H*(L-1)+out]

    # final self.lin — lane-pad the class dim to a multiple of 128 so the
    # kernel's stores are unmasked, then slice back.
    W_lin = _pad_lanes(params["W_lin"], axis=1).astype(jnp.bfloat16)
    b_lin = _pad_lanes(params["b_lin"], axis=1)
    out = linear(embds, W_lin, b_lin)[:, :num_classes]
    return out, pool_loss


# ---------------------------------- main ----------------------------------- #

if __name__ == "__main__":
    B, N = 2, 16                       # batch, max_nodes (small demo shapes)
    in_x, hid_x, out_x = 16, 128, 128  # lane-dense hidden/out channels
    in_e = 4
    num_classes, num_layers = 8, 3

    key = jax.random.PRNGKey(0)
    k_x, k_adj, k_e, k_p = jax.random.split(key, 4)

    x = jax.random.normal(k_x, (B, N, in_x), jnp.float32)
    adj = (jax.random.uniform(k_adj, (B, N, N)) > 0.7).astype(jnp.float32)
    adj = jnp.maximum(adj, jnp.swapaxes(adj, 1, 2))        # symmetric dense adjacency
    e = jax.random.normal(k_e, (B, N, N, in_e), jnp.float32) * adj[..., None]

    params = init_params(k_p, in_x, hid_x, out_x, num_classes, num_layers)

    out, pool_loss = densepool_e_forward(x, adj, e, params, num_layers=num_layers)
    jax.block_until_ready(out)
    jax.block_until_ready(pool_loss)

    assert out.shape == (B, num_classes)
    assert out.dtype == jnp.float32
    print("KERNEL_OK")
</pallas_src>

<mosaic_0001>
module attributes {stable_mosaic.version = 11 : i64} {
  func.func @_lin_relu_kernel(%arg0: i32, %arg1: memref<32x16xf32, #tpu.memory_space<vmem>>, %arg2: memref<16x128xbf16, #tpu.memory_space<vmem>>, %arg3: memref<1x128xf32, #tpu.memory_space<vmem>>, %arg4: memref<32x128xf32, #tpu.memory_space<vmem>>) attributes {dimension_semantics = [#tpu.dimension_semantics<parallel>], iteration_bounds = array<i64: 1>, scalar_prefetch = 0 : i64, scratch_operands = 0 : i64, tpu.core_type = #tpu.core_type<tc>, window_params = [{transform_indices = @transform_0, window_bounds = array<i64: 32, 16>}, {pipeline_mode = #tpu.pipeline_mode<synchronous>, transform_indices = @transform_1, window_bounds = array<i64: 16, 128>}, {pipeline_mode = #tpu.pipeline_mode<synchronous>, transform_indices = @transform_2, window_bounds = array<i64: 1, 128>}, {transform_indices = @transform_3, window_bounds = array<i64: 32, 128>}]} {
    %c0 = arith.constant 0 : index
    %c0_0 = arith.constant 0 : index
    %0 = vector.load %arg1[%c0, %c0_0] : memref<32x16xf32, #tpu.memory_space<vmem>>, vector<32x16xf32>
    %1 = arith.truncf %0 : vector<32x16xf32> to vector<32x16xbf16>
    %c0_1 = arith.constant 0 : index
    %c0_2 = arith.constant 0 : index
    %2 = vector.load %arg2[%c0_1, %c0_2] : memref<16x128xbf16, #tpu.memory_space<vmem>>, vector<16x128xbf16>
    %cst = arith.constant dense<0.000000e+00> : vector<32x128xf32>
    %3 = tpu.matmul %1, %2, %cst {dimension_numbers = #tpu.dot_dimension_numbers<[1], [0], [0], [1], [0, 0, 1, 1], [], []>} : vector<32x16xbf16>, vector<16x128xbf16>, vector<32x128xf32> -> vector<32x128xf32>
    %c0_3 = arith.constant 0 : index
    %c0_4 = arith.constant 0 : index
    %4 = vector.load %arg3[%c0_3, %c0_4] : memref<1x128xf32, #tpu.memory_space<vmem>>, vector<1x128xf32>
    %5 = vector.broadcast %4 : vector<1x128xf32> to vector<32x128xf32>
    %6 = arith.addf %3, %5 : vector<32x128xf32>
    %cst_5 = arith.constant 0.000000e+00 : f32
    %7 = vector.broadcast %cst_5 : f32 to vector<32x128xf32>
    %8 = arith.maximumf %6, %7 : vector<32x128xf32>
    %c0_6 = arith.constant 0 : index
    %c0_7 = arith.constant 0 : index
    %9 = vector.load %arg4[%c0_6, %c0_7] : memref<32x128xf32, #tpu.memory_space<vmem>>, vector<32x128xf32>
    tpu.vector_store %arg4[%c0_6, %c0_7], %8 {strides = array<i32>} : memref<32x128xf32, #tpu.memory_space<vmem>>, vector<32x128xf32>,
    return
  }
  func.func @transform_0(%arg0: i32) -> (i32, i32) {
    %c0_i32 = arith.constant 0 : i32
    %c0_i32_0 = arith.constant 0 : i32
    return %arg0, %c0_i32 : i32, i32
  }
  func.func @transform_1(%arg0: i32) -> (i32, i32) {
    %c0_i32 = arith.constant 0 : i32
    %c0_i32_0 = arith.constant 0 : i32
    %c0_i32_1 = arith.constant 0 : i32
    return %c0_i32, %c0_i32_0 : i32, i32
  }
  func.func @transform_2(%arg0: i32) -> (i32, i32) {
    %c0_i32 = arith.constant 0 : i32
    %c0_i32_0 = arith.constant 0 : i32
    %c0_i32_1 = arith.constant 0 : i32
    return %c0_i32, %c0_i32_0 : i32, i32
  }
  func.func @transform_3(%arg0: i32) -> (i32, i32) {
    %c0_i32 = arith.constant 0 : i32
    %c0_i32_0 = arith.constant 0 : i32
    return %arg0, %c0_i32 : i32, i32
  }
}

</mosaic_0001>

<llo_original>
// kernel: tpu_custom_call.1
$region0: #{tpu_custom_call.1}
  #allocation0 [shape = 'u32[]', space=smem, size = 0x4, offset = 0x4, fixed_abs, tag = 'smem constant byte address 0x4 - core index']
  #allocation1 [shape = 'u32[144,128]{1,0:T(1,128)}', space=vmem, size = 0x12000, scoped, tag = 'internal scratch']
  %s0 = inlined_call_operand.vmem [shape: f32[32,16], index: 0, kind: input, shape index: {}]
  %s1 = inlined_call_operand.vmem [shape: bf16[16,128], index: 1, kind: input, shape index: {}]
  %s2 = inlined_call_operand.vmem [shape: f32[1,128], index: 2, kind: input, shape index: {}]
  %s3 = inlined_call_operand.hbm [shape: f32[32,128], index: 3, kind: output, shape index: {}]
  %s4 = sld [smem:[#allocation0]]
  $region22: #{tpu_custom_call.1} parent=0
    _
  %s6 = ssub.s32 1, %s4
  %s7 = scalar_select 0, %s6, %s4
  $region1: #{tpu_custom_call.1} parent=0
    #allocation2 [shape = 'u8[16384]{0}', space=vmem, size = 0x4000, scoped, tag = 'output window, operand 0, single buffered']
    #allocation3 [shape = 's32[1]{0}', space=sflag, size = 0x4, scoped, tag = 'scoped memory for tpu_custom_call.1']
    %8 = vsyncpa [#allocation3], 0
    // Predicated region
    $region2: #{tpu_custom_call.1} parent=1 // pred_check
      _
    $region3: #{tpu_custom_call.1} parent=1 // pred_check_branch
      %10 = sbr.rel (0) target = $region5
    $region4: #{tpu_custom_call.1} parent=1 // pred_region
      _
    $region5: #{tpu_custom_call.1} parent=1 // pred_fallthru
      _
    // Predicated region
    $region6: #{tpu_custom_call.1} parent=1 // pred_check
      _
    $region7: #{tpu_custom_call.1} parent=1 // pred_check_branch
      %12 = sbr.rel (0) target = $region9
    $region8: #{tpu_custom_call.1} parent=1 // pred_region
      _
    $region9: #{tpu_custom_call.1} parent=1 // pred_fallthru
      _
    // Predicated region
    $region10: #{tpu_custom_call.1} parent=1 // pred_check
      _
    $region11: #{tpu_custom_call.1} parent=1 // pred_check_branch
      %14 = sbr.rel (0) target = $region13
    $region12: #{tpu_custom_call.1} parent=1 // pred_region
      _
    $region13: #{tpu_custom_call.1} parent=1 // pred_fallthru
      _
    %v16 = vld [vmem:[%s0] sm:$0xff]
    %v17 = vld [vmem:[%s0 + $0x8] sm:$0xff]
    %v18 = vld [vmem:[%s0 + $0x10] sm:$0xff]
    %v19 = vld [vmem:[%s0 + $0x18] sm:$0xff]
    %v20 = vpack.c.bf16 %v17, %v16
    %v21 = vpack.c.bf16 %v19, %v18
    %v22 = vld [vmem:[%s1] sm:$0xf]
    %v23 = vld [vmem:[%s1 + $0x4] sm:$0xf]
    %v24 = vld [vmem:[%s2] sm:$0x1]
    %v26 = vlaneseq
    %v27 = vshrl.u32 %v26, 7
    %v28 = vsub.s32 0, %v27
    %v29 = vrot.slane %v24, %v28
    %v33 = vunpack.c.l.b16 %v22
    %v34 = vunpack.c.l.b16 %v23
    %v35 = vpack.c.b16 %v34, %v33
    %vm37 = vcmask 130048
    %v39 = vsel %vm37, %v20, 0
    %v42 = vsel %vm37, %v21, 0
    %44 = vmatprep.subr.bf16.mxu0 0
    %45 = vmatpush1.bf16.msra.mxu0 %v35
    %46 = vmatprep.subr.bf16.mxu0 0
    %47 = vmatpush1.bf16.msra.mxu0 0
    %48 = vmatprep.subr.bf16.mxu0 0
    %49 = vmatpush1.bf16.msra.mxu0 0
    %50 = vmatprep.subr.bf16.mxu0 0
    %51 = vmatpush1.bf16.msra.mxu0 0
    %52 = vmatprep.subr.bf16.mxu0 0
    %53 = vmatpush1.bf16.msra.mxu0 0
    %54 = vmatprep.subr.bf16.mxu0 0
    %55 = vmatpush1.bf16.msra.mxu0 0
    %56 = vmatprep.subr.bf16.mxu0 0
    %57 = vmatpush1.bf16.msra.mxu0 0
    %58 = vmatprep.subr.bf16.mxu0 0
    %59 = vmatpush1.bf16.msra.mxu0 0
    %60 = vmatprep.subr.bf16.mxu0 0
    %61 = vmatpush1.bf16.msra.mxu0 0
    %62 = vmatprep.subr.bf16.mxu0 0
    %63 = vmatpush1.bf16.msra.mxu0 0
    %64 = vmatprep.subr.bf16.mxu0 0
    %65 = vmatpush1.bf16.msra.mxu0 0
    %66 = vmatprep.subr.bf16.mxu0 0
    %67 = vmatpush1.bf16.msra.mxu0 0
    %68 = vmatprep.subr.bf16.mxu0 0
    %69 = vmatpush1.bf16.msra.mxu0 0
    %70 = vmatprep.subr.bf16.mxu0 0
    %71 = vmatpush1.bf16.msra.mxu0 0
    %72 = vmatprep.subr.bf16.mxu0 0
    %73 = vmatpush1.bf16.msra.mxu0 0
    %74 = vmatprep.subr.bf16.mxu0 0
    %75 = vmatpush1.bf16.msra.mxu0 0
    %76 = vmatprep.mubr.bf16.mxu0 0
    %77 = vmatmul.mubr.bf16.gmra.mrb[0].mxu0 %v39
    %v78 = vpop.f32.mrb[0].mxu0
    %v79 = vadd.f32 %v29, %v78
    %v80 = vpop.f32.mrb[0].mxu0
    %v81 = vpop.f32.mrb[0].mxu0
    %v82 = vadd.f32 %v29, %v81
    %v83 = vpop.f32.mrb[0].mxu0
    %84 = vmatprep.mubr.bf16.mxu0 0
    %85 = vmatmul.mubr.bf16.gmra.mrb[0].mxu0 %v42
    %v86 = vpop.f32.mrb[0].mxu0
    %v87 = vadd.f32 %v29, %v86
    %v88 = vpop.f32.mrb[0].mxu0
    %v89 = vpop.f32.mrb[0].mxu0
    %v90 = vadd.f32 %v29, %v89
    %v91 = vpop.f32.mrb[0].mxu0
    %92 = vdwg.mxu0
    %v93 = vmax.f32 %v79, 0.0
    %v94 = vmax.f32 %v82, 0.0
    %v95 = vmax.f32 %v87, 0.0
    %v96 = vmax.f32 %v90, 0.0
    %97 = vst [vmem:[#allocation2] sm:$0xff] %v93
    %98 = vst [vmem:[#allocation2 + $0x8] sm:$0xff] %v94
    %99 = vst [vmem:[#allocation2 + $0x10] sm:$0xff] %v95
    %100 = vst [vmem:[#allocation2 + $0x18] sm:$0xff] %v96
    // Predicated region
    $region14: #{tpu_custom_call.1} parent=1 // pred_check
      _
    $region15: #{tpu_custom_call.1} parent=1 // pred_check_branch
      %102 = sbr.rel (0) target = $region17
    $region16: #{tpu_custom_call.1} parent=1 // pred_region
      %s104 = ssub.s32 512, 512
      %105 = vsyncadd [#allocation3], %s104
      %s106 = sshll.u32 [#allocation2], 4
      %s107 = int_to_ptr.vmem [resolvable:$true] %s106
      %112 = dma.vmem_to_hbm [thread:$0]  %s107, 512, %s3, [#allocation3], 128, 128, 8
    $region17: #{tpu_custom_call.1} parent=1 // pred_fallthru
      _
    // Predicated region
    $region18: #{tpu_custom_call.1} parent=1 // pred_check
      _
    $region19: #{tpu_custom_call.1} parent=1 // pred_check_branch
      %114 = sbr.rel (0) target = $region21
    $region20: #{tpu_custom_call.1} parent=1 // pred_region
      %115 = dma.done [#allocation3], 512
    $region21: #{tpu_custom_call.1} parent=1 // pred_fallthru
      _
    %116 = vsyncpa [#allocation3], 1

</llo_original>
